<compile_context>
chip_gen: v5e
topology: v5e:2x2
jax: 0.10.0
libtpu: 0.0.40
codegen_flags: <defaults>
</compile_context>

<pallas_src>
import functools

import jax
import jax.numpy as jnp
from jax import lax
from jax.experimental import pallas as pl
from jax.experimental.pallas import tpu as pltpu

LANE = 128


def _round_up(x, m):
    return (x + m - 1) // m * m


# ---------------------------------------------------------------------------
# Kernel
# ---------------------------------------------------------------------------
def _actor_kernel(state_ref, w1_ref, w2_ref, wh_ref, brow_ref, out_ref,
                  *, fc1_p, fc2_p, head_w, sig_off):
    # Static, 128-aligned column offsets into the packed bias/scale row:
    #   [ b1 (fc1_p) | b2 (fc2_p) | bmu|bsig packed (head_w) | max_action (head_w) ]
    o2 = fc1_p
    oh = fc1_p + fc2_p
    oa = oh + head_w

    x = state_ref[...]  # already bf16; no in-kernel cast

    # fc1 + ReLU (bf16 MXU operands, f32 accumulation / elementwise)
    h1 = jnp.dot(x, w1_ref[...], preferred_element_type=jnp.float32)
    h1 = jnp.maximum(h1 + brow_ref[:, :fc1_p], 0.0)

    # fc2 + ReLU
    h2 = jnp.dot(h1.astype(jnp.bfloat16), w2_ref[...],
                 preferred_element_type=jnp.float32)
    h2 = jnp.maximum(h2 + brow_ref[:, o2:o2 + fc2_p], 0.0)

    # Fused mu|sigma head: one matmul onto head_w lanes (128 when n_act <= 64).
    head = jnp.dot(h2.astype(jnp.bfloat16), wh_ref[...],
                   preferred_element_type=jnp.float32)
    head = head + brow_ref[:, oh:oh + head_w]

    amax = brow_ref[:, oa:oa + head_w]      # max_action in lanes [0, n_act), else 0
    lane = lax.broadcasted_iota(jnp.int32, head.shape, 1)
    mu_b = jnp.tanh(head) * amax
    # numerically stable softplus: max(x, 0) + log1p(exp(-|x|))
    sig_b = jnp.maximum(head, 0.0) + jnp.log1p(jnp.exp(-jnp.abs(head)))

    # Lane-dense, 128-aligned store of the packed [mu | sigma] slab (f32).
    out_ref[...] = jnp.where(lane < sig_off, mu_b, sig_b).astype(out_ref.dtype)


# ---------------------------------------------------------------------------
# One-time parameter packing (hoisted out of the per-forward path)
# ---------------------------------------------------------------------------
def pack_params(params, dtype=jnp.bfloat16):
    """Pack ActorNetwork params into an MXU/lane-friendly layout.

    Call once at init / after each optimizer step; the result is reused by
    every actor_forward call (no per-call pad/cast work).
    """
    w1, b1, w2, b2, wmu, bmu, wsig, bsig, amax = params
    in_dim, fc1 = w1.shape
    fc2 = w2.shape[1]
    n_act = wmu.shape[1]

    fc1_p = _round_up(fc1, LANE)
    fc2_p = _round_up(fc2, LANE)
    sig_off = _round_up(n_act, 64)                  # mu in [0,n_act), sigma at [sig_off, ...)
    head_w = _round_up(sig_off + n_act, LANE)       # 128 when n_act <= 64

    # Weights: bf16, lane-padded. Input (K) dim of w1 is left unpadded; Mosaic
    # pads K at the MXU, and state then streams unpadded.
    w1_p = jnp.zeros((in_dim, fc1_p), dtype).at[:, :fc1].set(w1.astype(dtype))
    w2_p = jnp.zeros((fc1_p, fc2_p), dtype).at[:fc1, :fc2].set(w2.astype(dtype))
    wh_p = jnp.zeros((fc2_p, head_w), dtype)
    wh_p = wh_p.at[:fc2, :n_act].set(wmu.astype(dtype))
    wh_p = wh_p.at[:fc2, sig_off:sig_off + n_act].set(wsig.astype(dtype))

    # Single packed f32 row: [ b1 | b2 | bmu|bsig | max_action ].
    brow_w = fc1_p + fc2_p + 2 * head_w
    brow = jnp.zeros((1, brow_w), jnp.float32)
    brow = brow.at[:, :fc1].set(jnp.reshape(b1, (1, fc1)))
    brow = brow.at[:, fc1_p:fc1_p + fc2].set(jnp.reshape(b2, (1, fc2)))
    oh = fc1_p + fc2_p
    brow = brow.at[:, oh:oh + n_act].set(jnp.reshape(bmu, (1, n_act)))
    brow = brow.at[:, oh + sig_off:oh + sig_off + n_act].set(jnp.reshape(bsig, (1, n_act)))
    oa = oh + head_w
    brow = brow.at[:, oa:oa + n_act].set(jnp.reshape(amax, (1, n_act)))

    meta = dict(in_dim=in_dim, fc1_p=fc1_p, fc2_p=fc2_p,
                n_act=n_act, sig_off=sig_off, head_w=head_w, brow_w=brow_w)
    packed = (w1_p, w2_p, wh_p, brow)
    return packed, meta


# ---------------------------------------------------------------------------
# Forward wrapper
# ---------------------------------------------------------------------------
def actor_forward(state, packed_params, meta):
    """Fused ActorNetwork forward. Returns (mu, sigma), each (B, n_actions) f32.

    `state` should be bf16 (cast is applied here only if needed); all weight
    packing is done once in pack_params().
    """
    w1_p, w2_p, wh_p, brow = packed_params
    in_dim = meta["in_dim"]
    fc1_p, fc2_p = meta["fc1_p"], meta["fc2_p"]
    head_w, sig_off = meta["head_w"], meta["sig_off"]
    n_act, brow_w = meta["n_act"], meta["brow_w"]

    B = state.shape[0]
    assert state.shape[1] == in_dim
    if state.dtype != jnp.bfloat16:
        state = state.astype(jnp.bfloat16)

    # Batch tile: multiple of 8 sublanes, capped at 512. When B > 8, pick the
    # tile so the "parallel" batch axis has >= 2 grid steps (v7x megacore).
    if B > 8:
        tb = min(512, _round_up(-(-B // 2), 8))
    else:
        tb = _round_up(max(B, 1), 8)
    grid = pl.cdiv(B, tb)

    # Output rows rounded to a sublane multiple only (no batch zero-pad of
    # state; the ragged last tile is handled by the pipeline and rows >= B
    # are sliced off below).
    out_rows = _round_up(B, 8)

    kernel = functools.partial(_actor_kernel, fc1_p=fc1_p, fc2_p=fc2_p,
                               head_w=head_w, sig_off=sig_off)

    out = pl.pallas_call(
        kernel,
        out_shape=jax.ShapeDtypeStruct((out_rows, head_w), jnp.float32),
        grid=(grid,),
        in_specs=[
            pl.BlockSpec((tb, in_dim), lambda i: (i, 0)),       # state: streams, bf16, unpadded
            pl.BlockSpec((in_dim, fc1_p), lambda i: (0, 0)),    # weights: VMEM-resident
            pl.BlockSpec((fc1_p, fc2_p), lambda i: (0, 0)),
            pl.BlockSpec((fc2_p, head_w), lambda i: (0, 0)),
            pl.BlockSpec((1, brow_w), lambda i: (0, 0)),        # packed biases + max_action
        ],
        out_specs=pl.BlockSpec((tb, head_w), lambda i: (i, 0)),
        compiler_params=pltpu.CompilerParams(
            dimension_semantics=("parallel",)),
    )(state, w1_p, w2_p, wh_p, brow)

    mu = out[:B, :n_act]
    sigma = out[:B, sig_off:sig_off + n_act]
    return mu, sigma


# ---------------------------------------------------------------------------
# Params + reference
# ---------------------------------------------------------------------------
def init_params(key, input_dim, fc1_dims, fc2_dims, n_actions, max_action):
    """Deterministic synthetic parameter init (Linear weights stored as (in, out))."""
    ks = jax.random.split(key, 8)
    scale = 0.1
    w1 = scale * jax.random.normal(ks[0], (input_dim, fc1_dims), jnp.float32)
    b1 = scale * jax.random.normal(ks[1], (1, fc1_dims), jnp.float32)
    w2 = scale * jax.random.normal(ks[2], (fc1_dims, fc2_dims), jnp.float32)
    b2 = scale * jax.random.normal(ks[3], (1, fc2_dims), jnp.float32)
    wmu = scale * jax.random.normal(ks[4], (fc2_dims, n_actions), jnp.float32)
    bmu = scale * jax.random.normal(ks[5], (1, n_actions), jnp.float32)
    wsig = scale * jax.random.normal(ks[6], (fc2_dims, n_actions), jnp.float32)
    bsig = scale * jax.random.normal(ks[7], (1, n_actions), jnp.float32)
    amax = jnp.asarray(max_action, jnp.float32).reshape(1, n_actions)
    return (w1, b1, w2, b2, wmu, bmu, wsig, bsig, amax)


def actor_forward_ref(state, params):
    """Pure-JAX f32 reference for correctness checking."""
    w1, b1, w2, b2, wmu, bmu, wsig, bsig, amax = params
    h1 = jax.nn.relu(state @ w1 + b1)
    h2 = jax.nn.relu(h1 @ w2 + b2)
    mu = jnp.tanh(h2 @ wmu + bmu) * amax
    sigma = jax.nn.softplus(h2 @ wsig + bsig)
    return mu, sigma


# TODO(synk): sample_normal (Normal rsample/log_prob), the Adam optimizer and
# checkpoint I/O are outside forward() and are not implemented as kernels.

if __name__ == "__main__":
    # Small shapes consistent with the module (input_dims -> fc1 -> fc2 -> n_actions).
    B = 8            # batch of states
    INPUT_DIM = 32   # input_dims
    FC1 = 64         # fc1_dims (512 in original, scaled down)
    FC2 = 32         # fc2_dims (256 in original, scaled down)
    N_ACT = 3        # max_action.shape[0] == n_actions

    key = jax.random.PRNGKey(0)
    k_state, k_params = jax.random.split(key)

    max_action = jnp.array([2.0, 1.0, 0.5], jnp.float32)
    params = init_params(k_params, INPUT_DIM, FC1, FC2, N_ACT, max_action)
    state = jax.random.normal(k_state, (B, INPUT_DIM), jnp.float32)

    # One-time packing (hoisted out of the per-forward path).
    packed, meta = pack_params(params)

    # Callers keep/pass state in bf16; cast here once for the demo.
    mu, sigma = actor_forward(state.astype(jnp.bfloat16), packed, meta)
    jax.block_until_ready((mu, sigma))

    mu_ref, sigma_ref = actor_forward_ref(state, params)
    assert mu.shape == (B, N_ACT) and sigma.shape == (B, N_ACT)
    # bf16 MXU operands / bf16 state (f32 accumulation) -> loosened tolerance.
    assert jnp.allclose(mu, mu_ref, atol=5e-2, rtol=5e-2)
    assert jnp.allclose(sigma, sigma_ref, atol=5e-2, rtol=5e-2)

    print("KERNEL_OK")
</pallas_src>

<mosaic_0001>
module attributes {stable_mosaic.version = 11 : i64} {
  func.func @_actor_kernel(%arg0: i32, %arg1: memref<8x32xbf16, #tpu.memory_space<vmem>>, %arg2: memref<32x128xbf16, #tpu.memory_space<vmem>>, %arg3: memref<128x128xbf16, #tpu.memory_space<vmem>>, %arg4: memref<128x128xbf16, #tpu.memory_space<vmem>>, %arg5: memref<1x512xf32, #tpu.memory_space<vmem>>, %arg6: memref<8x128xf32, #tpu.memory_space<vmem>>) attributes {dimension_semantics = [#tpu.dimension_semantics<parallel>], iteration_bounds = array<i64: 1>, scalar_prefetch = 0 : i64, scratch_operands = 0 : i64, tpu.core_type = #tpu.core_type<tc>, window_params = [{transform_indices = @transform_0, window_bounds = array<i64: 8, 32>}, {pipeline_mode = #tpu.pipeline_mode<synchronous>, transform_indices = @transform_1, window_bounds = array<i64: 32, 128>}, {pipeline_mode = #tpu.pipeline_mode<synchronous>, transform_indices = @transform_2, window_bounds = array<i64: 128, 128>}, {pipeline_mode = #tpu.pipeline_mode<synchronous>, transform_indices = @transform_3, window_bounds = array<i64: 128, 128>}, {pipeline_mode = #tpu.pipeline_mode<synchronous>, transform_indices = @transform_4, window_bounds = array<i64: 1, 512>}, {transform_indices = @transform_5, window_bounds = array<i64: 8, 128>}]} {
    %c0 = arith.constant 0 : index
    %c0_0 = arith.constant 0 : index
    %0 = vector.load %arg1[%c0, %c0_0] : memref<8x32xbf16, #tpu.memory_space<vmem>>, vector<8x32xbf16>
    %c0_1 = arith.constant 0 : index
    %c0_2 = arith.constant 0 : index
    %1 = vector.load %arg2[%c0_1, %c0_2] : memref<32x128xbf16, #tpu.memory_space<vmem>>, vector<32x128xbf16>
    %cst = arith.constant dense<0.000000e+00> : vector<8x128xf32>
    %2 = tpu.matmul %0, %1, %cst {dimension_numbers = #tpu.dot_dimension_numbers<[1], [0], [0], [1], [0, 0, 1, 1], [], []>} : vector<8x32xbf16>, vector<32x128xbf16>, vector<8x128xf32> -> vector<8x128xf32>
    %c0_3 = arith.constant 0 : index
    %c0_4 = arith.constant 0 : index
    %3 = vector.load %arg5[%c0_3, %c0_4] : memref<1x512xf32, #tpu.memory_space<vmem>>, vector<1x128xf32>
    %4 = vector.broadcast %3 : vector<1x128xf32> to vector<8x128xf32>
    %5 = arith.addf %2, %4 : vector<8x128xf32>
    %cst_5 = arith.constant 0.000000e+00 : f32
    %6 = vector.broadcast %cst_5 : f32 to vector<8x128xf32>
    %7 = arith.maximumf %5, %6 : vector<8x128xf32>
    %8 = arith.truncf %7 : vector<8x128xf32> to vector<8x128xbf16>
    %c0_6 = arith.constant 0 : index
    %c0_7 = arith.constant 0 : index
    %9 = vector.load %arg3[%c0_6, %c0_7] : memref<128x128xbf16, #tpu.memory_space<vmem>>, vector<128x128xbf16>
    %cst_8 = arith.constant dense<0.000000e+00> : vector<8x128xf32>
    %10 = tpu.matmul %8, %9, %cst_8 {dimension_numbers = #tpu.dot_dimension_numbers<[1], [0], [0], [1], [0, 0, 1, 1], [], []>} : vector<8x128xbf16>, vector<128x128xbf16>, vector<8x128xf32> -> vector<8x128xf32>
    %c0_9 = arith.constant 0 : index
    %c128 = arith.constant 128 : index
    %11 = vector.load %arg5[%c0_9, %c128] : memref<1x512xf32, #tpu.memory_space<vmem>>, vector<1x128xf32>
    %12 = vector.broadcast %11 : vector<1x128xf32> to vector<8x128xf32>
    %13 = arith.addf %10, %12 : vector<8x128xf32>
    %cst_10 = arith.constant 0.000000e+00 : f32
    %14 = vector.broadcast %cst_10 : f32 to vector<8x128xf32>
    %15 = arith.maximumf %13, %14 : vector<8x128xf32>
    %16 = arith.truncf %15 : vector<8x128xf32> to vector<8x128xbf16>
    %c0_11 = arith.constant 0 : index
    %c0_12 = arith.constant 0 : index
    %17 = vector.load %arg4[%c0_11, %c0_12] : memref<128x128xbf16, #tpu.memory_space<vmem>>, vector<128x128xbf16>
    %cst_13 = arith.constant dense<0.000000e+00> : vector<8x128xf32>
    %18 = tpu.matmul %16, %17, %cst_13 {dimension_numbers = #tpu.dot_dimension_numbers<[1], [0], [0], [1], [0, 0, 1, 1], [], []>} : vector<8x128xbf16>, vector<128x128xbf16>, vector<8x128xf32> -> vector<8x128xf32>
    %c0_14 = arith.constant 0 : index
    %c256 = arith.constant 256 : index
    %19 = vector.load %arg5[%c0_14, %c256] : memref<1x512xf32, #tpu.memory_space<vmem>>, vector<1x128xf32>
    %20 = vector.broadcast %19 : vector<1x128xf32> to vector<8x128xf32>
    %21 = arith.addf %18, %20 : vector<8x128xf32>
    %c0_15 = arith.constant 0 : index
    %c384 = arith.constant 384 : index
    %22 = vector.load %arg5[%c0_15, %c384] : memref<1x512xf32, #tpu.memory_space<vmem>>, vector<1x128xf32>
    %23 = tpu.iota {dimensions = array<i32: 1>} : vector<8x128xi32>
    %24 = math.tanh %21 : vector<8x128xf32>
    %25 = vector.broadcast %22 : vector<1x128xf32> to vector<8x128xf32>
    %26 = arith.mulf %24, %25 : vector<8x128xf32>
    %cst_16 = arith.constant 0.000000e+00 : f32
    %27 = vector.broadcast %cst_16 : f32 to vector<8x128xf32>
    %28 = arith.maximumf %21, %27 : vector<8x128xf32>
    %29 = math.absf %21 : vector<8x128xf32>
    %cst_17 = arith.constant 0.000000e+00 : f32
    %30 = vector.broadcast %cst_17 : f32 to vector<8x128xf32>
    %31 = arith.subf %30, %29 : vector<8x128xf32>
    %32 = math.exp %31 : vector<8x128xf32>
    %33 = math.log1p %32 : vector<8x128xf32>
    %34 = arith.addf %28, %33 : vector<8x128xf32>
    %c64_i32 = arith.constant 64 : i32
    %35 = vector.broadcast %c64_i32 : i32 to vector<8x128xi32>
    %36 = arith.cmpi slt, %23, %35 : vector<8x128xi32>
    %37 = arith.select %36, %26, %34 : vector<8x128xi1>, vector<8x128xf32>
    %c0_18 = arith.constant 0 : index
    %c0_19 = arith.constant 0 : index
    %38 = vector.load %arg6[%c0_18, %c0_19] : memref<8x128xf32, #tpu.memory_space<vmem>>, vector<8x128xf32>
    tpu.vector_store %arg6[%c0_18, %c0_19], %37 {strides = array<i32>} : memref<8x128xf32, #tpu.memory_space<vmem>>, vector<8x128xf32>,
    return
  }
  func.func @transform_0(%arg0: i32) -> (i32, i32) {
    %c0_i32 = arith.constant 0 : i32
    %c0_i32_0 = arith.constant 0 : i32
    return %arg0, %c0_i32 : i32, i32
  }
  func.func @transform_1(%arg0: i32) -> (i32, i32) {
    %c0_i32 = arith.constant 0 : i32
    %c0_i32_0 = arith.constant 0 : i32
    %c0_i32_1 = arith.constant 0 : i32
    return %c0_i32, %c0_i32_0 : i32, i32
  }
  func.func @transform_2(%arg0: i32) -> (i32, i32) {
    %c0_i32 = arith.constant 0 : i32
    %c0_i32_0 = arith.constant 0 : i32
    %c0_i32_1 = arith.constant 0 : i32
    return %c0_i32, %c0_i32_0 : i32, i32
  }
  func.func @transform_3(%arg0: i32) -> (i32, i32) {
    %c0_i32 = arith.constant 0 : i32
    %c0_i32_0 = arith.constant 0 : i32
    %c0_i32_1 = arith.constant 0 : i32
    return %c0_i32, %c0_i32_0 : i32, i32
  }
  func.func @transform_4(%arg0: i32) -> (i32, i32) {
    %c0_i32 = arith.constant 0 : i32
    %c0_i32_0 = arith.constant 0 : i32
    %c0_i32_1 = arith.constant 0 : i32
    return %c0_i32, %c0_i32_0 : i32, i32
  }
  func.func @transform_5(%arg0: i32) -> (i32, i32) {
    %c0_i32 = arith.constant 0 : i32
    %c0_i32_0 = arith.constant 0 : i32
    return %arg0, %c0_i32 : i32, i32
  }
}

</mosaic_0001>

<llo_original>
// kernel: tpu_custom_call.1
$region0: #{tpu_custom_call.1}
  #allocation0 [shape = 'u32[]', space=smem, size = 0x4, offset = 0x4, fixed_abs, tag = 'smem constant byte address 0x4 - core index']
  #allocation1 [shape = 'u32[72,128]{1,0:T(1,128)}', space=vmem, size = 0x9000, scoped, tag = 'internal scratch']
  %s0 = inlined_call_operand.hbm [shape: bf16[8,32], index: 0, kind: input, shape index: {}]
  %s1 = inlined_call_operand.hbm [shape: bf16[32,128], index: 1, kind: input, shape index: {}]
  %s2 = inlined_call_operand.hbm [shape: bf16[128,128], index: 2, kind: input, shape index: {}]
  %s3 = inlined_call_operand.hbm [shape: bf16[128,128], index: 3, kind: input, shape index: {}]
  %s4 = inlined_call_operand.hbm [shape: f32[1,512], index: 4, kind: input, shape index: {}]
  %s5 = inlined_call_operand.hbm [shape: f32[8,128], index: 5, kind: output, shape index: {}]
  %s6 = sld [smem:[#allocation0]]
  $region50: #{tpu_custom_call.1} parent=0
    _
  %s8 = ssub.s32 1, %s6
  %s9 = scalar_select 0, %s8, %s6
  $region1: #{tpu_custom_call.1} parent=0
    #allocation2 [shape = 'u8[2048]{0}', space=vmem, size = 0x800, scoped, tag = 'input window, operand 0, single buffered']
    #allocation3 [shape = 's32[1]{0}', space=sflag, size = 0x4, scoped, tag = 'scoped memory for tpu_custom_call.1']
    #allocation4 [shape = 's32[1]{0}', space=sflag, size = 0x4, scoped, tag = 'scoped memory for tpu_custom_call.1']
    #allocation5 [shape = 'u8[8192]{0}', space=vmem, size = 0x2000, scoped, tag = 'input window, operand 1, single buffered']
    #allocation6 [shape = 's32[1]{0}', space=sflag, size = 0x4, scoped, tag = 'scoped memory for tpu_custom_call.1']
    #allocation7 [shape = 'u8[32768]{0}', space=vmem, size = 0x8000, scoped, tag = 'input window, operand 2, single buffered']
    #allocation8 [shape = 'u8[32768]{0}', space=vmem, size = 0x8000, scoped, tag = 'input window, operand 3, single buffered']
    #allocation9 [shape = 's32[1]{0}', space=sflag, size = 0x4, scoped, tag = 'scoped memory for tpu_custom_call.1']
    #allocation10 [shape = 'u8[2048]{0}', space=vmem, size = 0x800, scoped, tag = 'input window, operand 4, single buffered']
    #allocation11 [shape = 'u8[4096]{0}', space=vmem, size = 0x1000, scoped, tag = 'output window, operand 0, single buffered']
    %10 = vsyncpa [#allocation3], 0
    %11 = vsyncpa [#allocation6], 0
    %12 = vsyncpa [#allocation9], 0
    %13 = vsyncpa [#allocation4], 0
    // Predicated region
    $region2: #{tpu_custom_call.1} parent=1 // pred_check
      _
    $region3: #{tpu_custom_call.1} parent=1 // pred_check_branch
      %15 = sbr.rel (0) target = $region5
    $region4: #{tpu_custom_call.1} parent=1 // pred_region
      %17 = vsyncadd [#allocation3], 0
      %s19 = sshll.u32 %s0, 4
      %s20 = int_to_ptr.hbm [resolvable:$true] %s19
      %s21 = sshll.u32 [#allocation2], 4
      %s22 = int_to_ptr.vmem [resolvable:$true] %s21
      %24 = dma.hbm_to_vmem [thread:$0]  %s20, 64, %s22, [#allocation3]
    $region5: #{tpu_custom_call.1} parent=1 // pred_fallthru
      _
    // Predicated region
    $region6: #{tpu_custom_call.1} parent=1 // pred_check
      _
    $region7: #{tpu_custom_call.1} parent=1 // pred_check_branch
      %26 = sbr.rel (0) target = $region9
    $region8: #{tpu_custom_call.1} parent=1 // pred_region
      %28 = vsyncadd [#allocation6], 0
      %s29 = sshll.u32 %s1, 4
      %s30 = int_to_ptr.hbm [resolvable:$true] %s29
      %s31 = sshll.u32 [#allocation5], 4
      %s32 = int_to_ptr.vmem [resolvable:$true] %s31
      %37 = dma.hbm_to_vmem [thread:$0]  %s30, 256, %s32, [#allocation6], 64, 64, 4
    $region9: #{tpu_custom_call.1} parent=1 // pred_fallthru
      _
    // Predicated region
    $region10: #{tpu_custom_call.1} parent=1 // pred_check
      _
    $region11: #{tpu_custom_call.1} parent=1 // pred_check_branch
      %39 = sbr.rel (0) target = $region13
    $region12: #{tpu_custom_call.1} parent=1 // pred_region
      %41 = vsyncadd [#allocation6], 0
      %s42 = sshll.u32 %s2, 4
      %s43 = int_to_ptr.hbm [resolvable:$true] %s42
      %s44 = sshll.u32 [#allocation7], 4
      %s45 = int_to_ptr.vmem [resolvable:$true] %s44
      %50 = dma.hbm_to_vmem [thread:$0]  %s43, 1024, %s45, [#allocation6], 64, 64, 4
    $region13: #{tpu_custom_call.1} parent=1 // pred_fallthru
      _
    // Predicated region
    $region14: #{tpu_custom_call.1} parent=1 // pred_check
      _
    $region15: #{tpu_custom_call.1} parent=1 // pred_check_branch
      %52 = sbr.rel (0) target = $region17
    $region16: #{tpu_custom_call.1} parent=1 // pred_region
      %54 = vsyncadd [#allocation9], 0
      %s55 = sshll.u32 %s3, 4
      %s56 = int_to_ptr.hbm [resolvable:$true] %s55
      %s57 = sshll.u32 [#allocation8], 4
      %s58 = int_to_ptr.vmem [resolvable:$true] %s57
      %63 = dma.hbm_to_vmem [thread:$0]  %s56, 1024, %s58, [#allocation9], 64, 64, 4
    $region17: #{tpu_custom_call.1} parent=1 // pred_fallthru
      _
    // Predicated region
    $region18: #{tpu_custom_call.1} parent=1 // pred_check
      _
    $region19: #{tpu_custom_call.1} parent=1 // pred_check_branch
      %65 = sbr.rel (0) target = $region21
    $region20: #{tpu_custom_call.1} parent=1 // pred_region
      %67 = vsyncadd [#allocation9], 0
      %s69 = sshll.u32 %s4, 4
      %s70 = int_to_ptr.hbm [resolvable:$true] %s69
      %s71 = sshll.u32 [#allocation10], 4
      %s72 = int_to_ptr.vmem [resolvable:$true] %s71
      %74 = dma.hbm_to_vmem [thread:$0]  %s70, 64, %s72, [#allocation9]
    $region21: #{tpu_custom_call.1} parent=1 // pred_fallthru
      _
    // Predicated region
    $region22: #{tpu_custom_call.1} parent=1 // pred_check
      _
    $region23: #{tpu_custom_call.1} parent=1 // pred_check_branch
      %76 = sbr.rel (0) target = $region25
    $region24: #{tpu_custom_call.1} parent=1 // pred_region
      %78 = dma.done [#allocation3], 64
    $region25: #{tpu_custom_call.1} parent=1 // pred_fallthru
      _
    // Predicated region
    $region26: #{tpu_custom_call.1} parent=1 // pred_check
      _
    $region27: #{tpu_custom_call.1} parent=1 // pred_check_branch
      %80 = sbr.rel (0) target = $region29
    $region28: #{tpu_custom_call.1} parent=1 // pred_region
      %82 = dma.done [#allocation6], 256
    $region29: #{tpu_custom_call.1} parent=1 // pred_fallthru
      _
    // Predicated region
    $region30: #{tpu_custom_call.1} parent=1 // pred_check
      _
    $region31: #{tpu_custom_call.1} parent=1 // pred_check_branch
      %84 = sbr.rel (0) target = $region33
    $region32: #{tpu_custom_call.1} parent=1 // pred_region
      %86 = dma.done [#allocation6], 1024
    $region33: #{tpu_custom_call.1} parent=1 // pred_fallthru
      _
    // Predicated region
    $region34: #{tpu_custom_call.1} parent=1 // pred_check
      _
    $region35: #{tpu_custom_call.1} parent=1 // pred_check_branch
      %88 = sbr.rel (0) target = $region37
    $region36: #{tpu_custom_call.1} parent=1 // pred_region
      %90 = dma.done [#allocation9], 1024
    $region37: #{tpu_custom_call.1} parent=1 // pred_fallthru
      _
    // Predicated region
    $region38: #{tpu_custom_call.1} parent=1 // pred_check
      _
    $region39: #{tpu_custom_call.1} parent=1 // pred_check_branch
      %92 = sbr.rel (0) target = $region41
    $region40: #{tpu_custom_call.1} parent=1 // pred_region
      %94 = dma.done [#allocation9], 64
    $region41: #{tpu_custom_call.1} parent=1 // pred_fallthru
      _
    %v96 = vld [vmem:[#allocation2] sm:$0xf]
    %v97 = vld [vmem:[#allocation5] sm:$0xf]
    %v98 = vld [vmem:[#allocation5 + $0x4] sm:$0xf]
    %v99 = vld [vmem:[#allocation5 + $0x8] sm:$0xf]
    %v100 = vld [vmem:[#allocation5 + $0xc] sm:$0xf]
    %v101 = vld [vmem:[#allocation10] sm:$0x1]
    %v103 = vperm.slane %v101, 0
    %v109 = vunpack.c.l.b16 %v97
    %v110 = vunpack.c.l.b16 %v98
    %v111 = vunpack.c.l.b16 %v99
    %v112 = vunpack.c.l.b16 %v100
    %v113 = vpack.c.b16 %v110, %v109
    %v114 = vpack.c.b16 %v112, %v111
    %vm117 = vcmask 261120
    %v119 = vsel %vm117, %v96, 0
    %121 = vmatpush.bf16.msra.mxu0 0
    %122 = vmatpush.bf16.msra.mxu0 0
    %123 = vmatpush.bf16.msra.mxu0 0
    %124 = vmatpush.bf16.msra.mxu0 0
    %125 = vmatpush.bf16.msra.mxu0 0
    %126 = vmatpush.bf16.msra.mxu0 0
    %127 = vmatpush.bf16.msra.mxu0 %v114
    %128 = vmatpush.bf16.msra.mxu0 %v113
    %129 = vmatmul.bf16.gmra.mxu0 %v119
    %v130 = vpop.f32.mrf.mxu0
    %v131 = vadd.f32 %v103, %v130
    %v132 = vpop.f32.mrf.mxu0
    %133 = vdwg.mxu0
    %v134 = vmax.f32 %v131, 0.0
    %v135 = vpack.c.bf16 %v134, %v134
    %v136 = vld [vmem:[#allocation7] sm:$0xf]
    %v137 = vld [vmem:[#allocation7 + $0x4] sm:$0xf]
    %v138 = vld [vmem:[#allocation7 + $0x8] sm:$0xf]
    %v139 = vld [vmem:[#allocation7 + $0xc] sm:$0xf]
    %v140 = vld [vmem:[#allocation7 + $0x10] sm:$0xf]
    %v141 = vld [vmem:[#allocation7 + $0x14] sm:$0xf]
    %v142 = vld [vmem:[#allocation7 + $0x18] sm:$0xf]
    %v143 = vld [vmem:[#allocation7 + $0x1c] sm:$0xf]
    %v144 = vld [vmem:[#allocation7 + $0x20] sm:$0xf]
    %v145 = vld [vmem:[#allocation7 + $0x24] sm:$0xf]
    %v146 = vld [vmem:[#allocation7 + $0x28] sm:$0xf]
    %v147 = vld [vmem:[#allocation7 + $0x2c] sm:$0xf]
    %v148 = vld [vmem:[#allocation7 + $0x30] sm:$0xf]
    %v149 = vld [vmem:[#allocation7 + $0x34] sm:$0xf]
    %v150 = vld [vmem:[#allocation7 + $0x38] sm:$0xf]
    %v151 = vld [vmem:[#allocation7 + $0x3c] sm:$0xf]
    %v152 = vld [vmem:[#allocation10 + $0x1] sm:$0x1]
    %v154 = vperm.slane %v152, 0
    %v172 = vunpack.c.l.b16 %v136
    %v173 = vunpack.c.l.b16 %v137
    %v174 = vunpack.c.l.b16 %v138
    %v175 = vunpack.c.l.b16 %v139
    %v176 = vunpack.c.l.b16 %v140
    %v177 = vunpack.c.l.b16 %v141
    %v178 = vunpack.c.l.b16 %v142
    %v179 = vunpack.c.l.b16 %v143
    %v180 = vunpack.c.l.b16 %v144
    %v181 = vunpack.c.l.b16 %v145
    %v182 = vunpack.c.l.b16 %v146
    %v183 = vunpack.c.l.b16 %v147
    %v184 = vunpack.c.l.b16 %v148
    %v185 = vunpack.c.l.b16 %v149
    %v186 = vunpack.c.l.b16 %v150
    %v187 = vunpack.c.l.b16 %v151
    %v188 = vpack.c.b16 %v173, %v172
    %v189 = vpack.c.b16 %v175, %v174
    %v190 = vpack.c.b16 %v177, %v176
    %v191 = vpack.c.b16 %v179, %v178
    %v192 = vpack.c.b16 %v181, %v180
    %v193 = vpack.c.b16 %v183, %v182
    %v194 = vpack.c.b16 %v185, %v184
    %v195 = vpack.c.b16 %v187, %v186
    %204 = vmatpush.bf16.msra.mxu0 %v195
    %205 = vmatpush.bf16.msra.mxu0 %v194
    %206 = vmatpush.bf16.msra.mxu0 %v193
    %207 = vmatpush.bf16.msra.mxu0 %v192
    %208 = vmatpush.bf16.msra.mxu0 %v191
    %209 = vmatpush.bf16.msra.mxu0 %v190
    %210 = vmatpush.bf16.msra.mxu0 %v189
    %211 = vmatpush.bf16.msra.mxu0 %v188
    %212 = vmatmul.bf16.gmra.mxu0 %v135
    %v213 = vpop.f32.mrf.mxu0
    %v214 = vadd.f32 %v154, %v213
    %v215 = vpop.f32.mrf.mxu0
    %216 = vdwg.mxu0
    %v217 = vmax.f32 %v214, 0.0
    %v218 = vpack.c.bf16 %v217, %v217
    %v219 = vld [vmem:[#allocation8] sm:$0xf]
    %v220 = vld [vmem:[#allocation8 + $0x4] sm:$0xf]
    %v221 = vld [vmem:[#allocation8 + $0x8] sm:$0xf]
    %v222 = vld [vmem:[#allocation8 + $0xc] sm:$0xf]
    %v223 = vld [vmem:[#allocation8 + $0x10] sm:$0xf]
    %v224 = vld [vmem:[#allocation8 + $0x14] sm:$0xf]
    %v225 = vld [vmem:[#allocation8 + $0x18] sm:$0xf]
    %v226 = vld [vmem:[#allocation8 + $0x1c] sm:$0xf]
    %v227 = vld [vmem:[#allocation8 + $0x20] sm:$0xf]
    %v228 = vld [vmem:[#allocation8 + $0x24] sm:$0xf]
    %v229 = vld [vmem:[#allocation8 + $0x28] sm:$0xf]
    %v230 = vld [vmem:[#allocation8 + $0x2c] sm:$0xf]
    %v231 = vld [vmem:[#allocation8 + $0x30] sm:$0xf]
    %v232 = vld [vmem:[#allocation8 + $0x34] sm:$0xf]
    %v233 = vld [vmem:[#allocation8 + $0x38] sm:$0xf]
    %v234 = vld [vmem:[#allocation8 + $0x3c] sm:$0xf]
    %v235 = vld [vmem:[#allocation10 + $0x2] sm:$0x1]
    %v237 = vperm.slane %v235, 0
    %v255 = vunpack.c.l.b16 %v219
    %v256 = vunpack.c.l.b16 %v220
    %v257 = vunpack.c.l.b16 %v221
    %v258 = vunpack.c.l.b16 %v222
    %v259 = vunpack.c.l.b16 %v223
    %v260 = vunpack.c.l.b16 %v224
    %v261 = vunpack.c.l.b16 %v225
    %v262 = vunpack.c.l.b16 %v226
    %v263 = vunpack.c.l.b16 %v227
    %v264 = vunpack.c.l.b16 %v228
    %v265 = vunpack.c.l.b16 %v229
    %v266 = vunpack.c.l.b16 %v230
    %v267 = vunpack.c.l.b16 %v231
    %v268 = vunpack.c.l.b16 %v232
    %v269 = vunpack.c.l.b16 %v233
    %v270 = vunpack.c.l.b16 %v234
    %v271 = vpack.c.b16 %v256, %v255
    %v272 = vpack.c.b16 %v258, %v257
    %v273 = vpack.c.b16 %v260, %v259
    %v274 = vpack.c.b16 %v262, %v261
    %v275 = vpack.c.b16 %v264, %v263
    %v276 = vpack.c.b16 %v266, %v265
    %v277 = vpack.c.b16 %v268, %v267
    %v278 = vpack.c.b16 %v270, %v269
    %287 = vmatpush.bf16.msra.mxu0 %v278
    %288 = vmatpush.bf16.msra.mxu0 %v277
    %289 = vmatpush.bf16.msra.mxu0 %v276
    %290 = vmatpush.bf16.msra.mxu0 %v275
    %291 = vmatpush.bf16.msra.mxu0 %v274
    %292 = vmatpush.bf16.msra.mxu0 %v273
    %293 = vmatpush.bf16.msra.mxu0 %v272
    %294 = vmatpush.bf16.msra.mxu0 %v271
    %295 = vmatmul.bf16.gmra.mxu0 %v218
    %v296 = vpop.f32.mrf.mxu0
    %v297 = vadd.f32 %v237, %v296
    %v298 = vpop.f32.mrf.mxu0
    %299 = vdwg.mxu0
    %v300 = vld [vmem:[#allocation10 + $0x3] sm:$0x1]
    %v301 = vlaneseq
    %v302 = vand.u32 %v301, 127
    %v303 = vtanh.pop %v297
    %v305 = vperm.slane %v300, 0
    %v307 = vmul.f32 %v303, %v305
    %v308 = vmax.f32 %v297, 0.0
    %v309 = vand.u32 2147483647, %v297
    %v310 = vsub.f32 0.0, %v309
    %v311 = vmul.f32 %v310, 1.442695
    %v312 = vpow.pop %v311
    %v313 = vadd.f32 %v312, 1.0
    %v314 = vlog2.pop %v313
    %v315 = vmul.f32 %v314, 0.6931472
    %v316 = vmul.f32 -0.5, %v312
    %v317 = vadd.f32 %v316, 1.0
    %v318 = vmul.f32 %v317, %v312
    %v319 = vand.u32 2147483647, %v312
    %vm320 = vcmp.lt.f32.partialorder %v319, 0.0004427343
    %v321 = vsel %vm320, %v318, %v315
    %v322 = vadd.f32 %v308, %v321
    %vm323 = vcmp.lt.s32.totalorder %v302, 64
    %v324 = vsel %vm323, %v307, %v322
    %325 = vst [vmem:[#allocation11] sm:$0xff] %v324
    // Predicated region
    $region42: #{tpu_custom_call.1} parent=1 // pred_check
      _
    $region43: #{tpu_custom_call.1} parent=1 // pred_check_branch
      %327 = sbr.rel (0) target = $region45
    $region44: #{tpu_custom_call.1} parent=1 // pred_region
      %329 = vsyncadd [#allocation4], 0
      %s331 = sshll.u32 [#allocation11], 4
      %s332 = int_to_ptr.vmem [resolvable:$true] %s331
      %s333 = sshll.u32 %s5, 4
      %s334 = int_to_ptr.hbm [resolvable:$true] %s333
      %336 = dma.vmem_to_hbm [thread:$0]  %s332, 128, %s334, [#allocation4]
    $region45: #{tpu_custom_call.1} parent=1 // pred_fallthru
      _
    // Predicated region
    $region46: #{tpu_custom_call.1} parent=1 // pred_check
      _
    $region47: #{tpu_custom_call.1} parent=1 // pred_check_branch
      %338 = sbr.rel (0) target = $region49
    $region48: #{tpu_custom_call.1} parent=1 // pred_region
      %340 = dma.done [#allocation4], 128
    $region49: #{tpu_custom_call.1} parent=1 // pred_fallthru
      _
    %341 = vsyncpa [#allocation3], 1
    %342 = vsyncpa [#allocation6], 1
    %343 = vsyncpa [#allocation9], 1
    %344 = vsyncpa [#allocation4], 1

</llo_original>
